<compile_context>
chip_gen: v6e
topology: v6e:2x2x1
jax: 0.10.0
libtpu: 0.0.40
codegen_flags: <defaults>
</compile_context>

<pallas_src>
import math
import numpy as np
import jax
import jax.numpy as jnp
from jax import lax
from jax.experimental import pallas as pl
from jax.experimental.pallas import tpu as pltpu

# --- model hyper-parameters (small, consistent with the module) ---
BATCH = 2
SEQ = 8
D_MODEL = 32
N_HEADS = 8
HEAD_DIM = D_MODEL // N_HEADS
D_FF = 64
N_QUBITS = 8
ALPHA = 0.7
LN_EPS = 1e-5
ENT_EPS = 1e-8
NEG_INF = -1e30

BS = BATCH * SEQ                 # 16 flattened (batch*seq) rows
REP = BS * N_QUBITS              # 128 = exactly one f32 vreg lane width

# --- sublane-packed weight slab: every tensor at lane 0, 8-row-aligned ---
W_LANES = 128
_R_QKV = 0                       # (32,  96)  fused [wq | wk | wv]
_R_WO = 32                       # (32,  32)
_R_W1 = 64                       # (32,  64)
_R_W2 = 96                       # (64,  32)
_R_GT = 160                      # (16, 128)  Z      -> z_rep expander
_R_G = 176                       # (128, 16)  grouped-lane reducer
_R_EREP = 304                    # (8,  128)  e      -> e_rep expander
_R_MASK = 312                    # (16,  16)  block-diagonal additive mask
W_ROWS = 328

# --- bias / LayerNorm buffer: one vector per sublane row, lane 0 ---
B_ROWS, B_LANES = 8, 128
_B_QKV, _B_O, _B_1, _B_2, _B_G1, _B_BE1, _B_G2, _B_BE2 = range(8)

_SCALE = 1.0 / (N_HEADS * math.sqrt(HEAD_DIM))


def _layernorm(x, gamma, beta):
    mu = jnp.mean(x, axis=-1, keepdims=True)
    xc = x - mu
    var = jnp.mean(xc * xc, axis=-1, keepdims=True)
    inv = lax.rsqrt(var + LN_EPS)
    return xc * inv * gamma + beta


def qtb_kernel(x_ref, w_ref, b_ref, o_ref):
    x = x_ref[...]                                            # (16, 32)

    # ---- static, lane-0, sublane-aligned slices (free views) ----
    w_qkv = w_ref[_R_QKV:_R_QKV + D_MODEL, 0:3 * D_MODEL]     # (32, 96)
    w_o = w_ref[_R_WO:_R_WO + D_MODEL, 0:D_MODEL]             # (32, 32)
    w_1 = w_ref[_R_W1:_R_W1 + D_MODEL, 0:D_FF]                # (32, 64)
    w_2 = w_ref[_R_W2:_R_W2 + D_FF, 0:D_MODEL]                # (64, 32)
    GT = w_ref[_R_GT:_R_GT + BS, 0:REP]                       # (16, 128)
    G = w_ref[_R_G:_R_G + REP, 0:BS]                          # (128, 16)
    E_rep = w_ref[_R_EREP:_R_EREP + N_QUBITS, 0:REP]          # (8, 128)
    mask = w_ref[_R_MASK:_R_MASK + BS, 0:BS]                  # (16, 16)

    b_qkv = b_ref[_B_QKV:_B_QKV + 1, 0:3 * D_MODEL]           # (1, 96)
    b_o = b_ref[_B_O:_B_O + 1, 0:D_MODEL]
    b_1 = b_ref[_B_1:_B_1 + 1, 0:D_FF]
    b_2 = b_ref[_B_2:_B_2 + 1, 0:D_MODEL]
    g1 = b_ref[_B_G1:_B_G1 + 1, 0:D_MODEL]
    be1 = b_ref[_B_BE1:_B_BE1 + 1, 0:D_MODEL]
    g2 = b_ref[_B_G2:_B_G2 + 1, 0:D_MODEL]
    be2 = b_ref[_B_BE2:_B_BE2 + 1, 0:D_MODEL]

    # ---- fused Q/K/V projection over the whole flattened batch ----
    qkv = jnp.dot(x, w_qkv, preferred_element_type=jnp.float32) + b_qkv  # (16, 96)
    q = qkv[:, 0:D_MODEL]
    k = qkv[:, D_MODEL:2 * D_MODEL]
    v = qkv[:, 2 * D_MODEL:3 * D_MODEL]

    # ---- classical scores: mean over heads == (Q @ K^T) / (H * sqrt(hd)) ----
    classical = lax.dot_general(
        q, k, (((1,), (1,)), ((), ())),
        preferred_element_type=jnp.float32) * _SCALE                     # (16, 16)

    # ---- quantum "entanglement" scores, fully vectorized over (16, .) ----
    # entropy of softmax over concat(tanh(x_i)[:nq], tanh(x_j)[:nq])
    e = jnp.exp(jnp.tanh(x[:, 0:N_QUBITS]))                              # (16, 8)
    s = jnp.sum(e, axis=-1, keepdims=True)                               # (16, 1)
    Z = s + s.T                                                          # (16, 16)
    z_rep = jnp.dot(Z, GT, preferred_element_type=jnp.float32)           # (16, 128)
    e_rep = jnp.dot(e, E_rep, preferred_element_type=jnp.float32)        # (16, 128)
    pa = e_rep / z_rep                                                   # one divide
    ta = jnp.dot(pa * jnp.log(pa + ENT_EPS), G,
                 preferred_element_type=jnp.float32)                     # (16, 16)
    # key-side term is the transpose of the query-side term (Z symmetric)
    quantum = -(ta + ta.T)

    # ---- combine, mask out cross-batch pairs, softmax, attend ----
    scores = ALPHA * classical + (1.0 - ALPHA) * quantum + mask
    mx = jnp.max(scores, axis=-1, keepdims=True)
    ex = jnp.exp(scores - mx)
    attn = ex / jnp.sum(ex, axis=-1, keepdims=True)                      # (16, 16)
    attended = jnp.dot(attn, v, preferred_element_type=jnp.float32)      # (16, 32)
    attn_out = jnp.dot(attended, w_o, preferred_element_type=jnp.float32) + b_o

    # residual + LayerNorm 1 (dropout = identity)
    x1 = _layernorm(x + attn_out, g1, be1)

    # feed-forward: Linear -> ReLU -> Linear
    h = jnp.maximum(jnp.dot(x1, w_1, preferred_element_type=jnp.float32) + b_1, 0.0)
    ff = jnp.dot(h, w_2, preferred_element_type=jnp.float32) + b_2

    # residual + LayerNorm 2 — single store for the whole batch
    o_ref[...] = _layernorm(x1 + ff, g2, be2)


def _indicator_constants():
    c = np.arange(REP)
    gt = (c[None, :] // N_QUBITS == np.arange(BS)[:, None]).astype(np.float32)       # (16,128)
    g = np.ascontiguousarray(gt.T)                                                   # (128,16)
    erep = (c[None, :] % N_QUBITS == np.arange(N_QUBITS)[:, None]).astype(np.float32)  # (8,128)
    blk = np.arange(BS) // SEQ
    mask = np.where(blk[:, None] == blk[None, :], 0.0, NEG_INF).astype(np.float32)   # (16,16)
    return gt, g, erep, mask


def _pack_params(params):
    (wq, bq, wk, bk, wv, bv, wo, bo, g1, be1, w1, bf1, w2, bf2, g2, be2) = params
    gt, g, erep, mask = _indicator_constants()

    def pad(a, rows):
        a = jnp.asarray(a, jnp.float32)
        return jnp.pad(a, ((0, rows - a.shape[0]), (0, W_LANES - a.shape[1])))

    w_all = jnp.concatenate([
        pad(jnp.concatenate([wq, wk, wv], axis=1), 32),   # rows   0: 32
        pad(wo, 32),                                      # rows  32: 64
        pad(w1, 32),                                      # rows  64: 96
        pad(w2, 64),                                      # rows  96:160
        pad(gt, 16),                                      # rows 160:176
        pad(g, 128),                                      # rows 176:304
        pad(erep, 8),                                     # rows 304:312
        pad(mask, 16),                                    # rows 312:328
    ], axis=0)                                            # (328, 128)

    def brow(v):
        v = jnp.asarray(v, jnp.float32).reshape(1, -1)
        return jnp.pad(v, ((0, 0), (0, B_LANES - v.shape[1])))

    b_all = jnp.concatenate([
        brow(jnp.concatenate([bq, bk, bv], axis=1)),
        brow(bo), brow(bf1), brow(bf2),
        brow(g1), brow(be1), brow(g2), brow(be2),
    ], axis=0)                                            # (8, 128)
    return w_all, b_all


@jax.jit
def quantum_transformer_block(x, params):
    B, S, D = x.shape
    assert (B, S, D) == (BATCH, SEQ, D_MODEL)
    w_all, b_all = _pack_params(params)
    x2 = x.reshape(BS, D_MODEL)

    out2 = pl.pallas_call(
        qtb_kernel,
        out_shape=jax.ShapeDtypeStruct((BS, D_MODEL), jnp.float32),
        grid=(1,),                                        # whole batch in one step
        in_specs=[
            pl.BlockSpec((BS, D_MODEL), lambda i: (0, 0)),
            pl.BlockSpec((W_ROWS, W_LANES), lambda i: (0, 0)),
            pl.BlockSpec((B_ROWS, B_LANES), lambda i: (0, 0)),
        ],
        out_specs=pl.BlockSpec((BS, D_MODEL), lambda i: (0, 0)),
        compiler_params=pltpu.CompilerParams(dimension_semantics=("arbitrary",)),
    )(x2, w_all, b_all)
    return out2.reshape(B, S, D)


def reference(x, params):
    """Pure-JAX reference with the same math (for a sanity check)."""
    (wq, bq, wk, bk, wv, bv, wo, bo, g1, be1, w1, bf1, w2, bf2, g2, be2) = params
    q = x @ wq + bq
    k = x @ wk + bk
    v = x @ wv + bv
    classical_mean = (q @ jnp.swapaxes(k, -1, -2)) / (N_HEADS * math.sqrt(HEAD_DIM))

    enc = jnp.tanh(x[:, :, :N_QUBITS])
    e = jnp.exp(enc)                                        # (B, S, nq)
    s = jnp.sum(e, axis=-1)                                 # (B, S)
    Z = s[:, :, None] + s[:, None, :]                       # (B, S, S)
    pa = e[:, :, None, :] / Z[..., None]                    # (B, S, S, nq)
    pb = e[:, None, :, :] / Z[..., None]
    quantum = -(jnp.sum(pa * jnp.log(pa + ENT_EPS), -1)
                + jnp.sum(pb * jnp.log(pb + ENT_EPS), -1))  # (B, S, S)

    scores = ALPHA * classical_mean + (1.0 - ALPHA) * quantum
    attn = jax.nn.softmax(scores, axis=-1)
    attn_out = (attn @ v) @ wo + bo

    def ln(y, g, b):
        mu = jnp.mean(y, -1, keepdims=True)
        var = jnp.mean((y - mu) ** 2, -1, keepdims=True)
        return (y - mu) / jnp.sqrt(var + LN_EPS) * g + b

    x1 = ln(x + attn_out, g1, be1)
    ff = jnp.maximum(x1 @ w1 + bf1, 0.0) @ w2 + bf2
    return ln(x1 + ff, g2, be2)


def init_params(key):
    ks = jax.random.split(key, 8)

    def lin(k, fin, fout):
        kw, kb = jax.random.split(k)
        w = jax.random.normal(kw, (fin, fout), jnp.float32) * 0.05
        b = jax.random.normal(kb, (1, fout), jnp.float32) * 0.05
        return w, b

    wq, bq = lin(ks[0], D_MODEL, D_MODEL)
    wk, bk = lin(ks[1], D_MODEL, D_MODEL)
    wv, bv = lin(ks[2], D_MODEL, D_MODEL)
    wo, bo = lin(ks[3], D_MODEL, D_MODEL)
    w1, bf1 = lin(ks[4], D_MODEL, D_FF)
    w2, bf2 = lin(ks[5], D_FF, D_MODEL)
    g1 = jnp.ones((1, D_MODEL), jnp.float32)
    be1 = jnp.zeros((1, D_MODEL), jnp.float32)
    g2 = jnp.ones((1, D_MODEL), jnp.float32)
    be2 = jnp.zeros((1, D_MODEL), jnp.float32)
    return (wq, bq, wk, bk, wv, bv, wo, bo, g1, be1, w1, bf1, w2, bf2, g2, be2)


if __name__ == "__main__":
    key = jax.random.PRNGKey(0)
    kx, kp = jax.random.split(key)
    x = jax.random.normal(kx, (BATCH, SEQ, D_MODEL), jnp.float32)
    params = init_params(kp)

    out = quantum_transformer_block(x, params)
    out = jax.block_until_ready(out)

    ref = reference(x, params)
    assert out.shape == (BATCH, SEQ, D_MODEL)
    assert jnp.allclose(out, ref, rtol=1e-4, atol=1e-4), "mismatch vs reference"

    print("KERNEL_OK")
</pallas_src>

<mosaic_0001>
module attributes {stable_mosaic.version = 11 : i64} {
  func.func @qtb_kernel(%arg0: i32, %arg1: memref<16x32xf32, #tpu.memory_space<vmem>>, %arg2: memref<328x128xf32, #tpu.memory_space<vmem>>, %arg3: memref<8x128xf32, #tpu.memory_space<vmem>>, %arg4: memref<16x32xf32, #tpu.memory_space<vmem>>) attributes {dimension_semantics = [#tpu.dimension_semantics<arbitrary>], iteration_bounds = array<i64: 1>, scalar_prefetch = 0 : i64, scratch_operands = 0 : i64, tpu.core_type = #tpu.core_type<tc>, window_params = [{pipeline_mode = #tpu.pipeline_mode<synchronous>, transform_indices = @transform_0, window_bounds = array<i64: 16, 32>}, {pipeline_mode = #tpu.pipeline_mode<synchronous>, transform_indices = @transform_1, window_bounds = array<i64: 328, 128>}, {pipeline_mode = #tpu.pipeline_mode<synchronous>, transform_indices = @transform_2, window_bounds = array<i64: 8, 128>}, {pipeline_mode = #tpu.pipeline_mode<synchronous>, transform_indices = @transform_3, window_bounds = array<i64: 16, 32>}]} {
    %c0 = arith.constant 0 : index
    %c0_0 = arith.constant 0 : index
    %0 = vector.load %arg1[%c0, %c0_0] : memref<16x32xf32, #tpu.memory_space<vmem>>, vector<16x32xf32>
    %c0_1 = arith.constant 0 : index
    %c0_2 = arith.constant 0 : index
    %1 = vector.load %arg2[%c0_1, %c0_2] : memref<328x128xf32, #tpu.memory_space<vmem>>, vector<32x96xf32>
    %c32 = arith.constant 32 : index
    %c0_3 = arith.constant 0 : index
    %2 = vector.load %arg2[%c32, %c0_3] : memref<328x128xf32, #tpu.memory_space<vmem>>, vector<32x32xf32>
    %c64 = arith.constant 64 : index
    %c0_4 = arith.constant 0 : index
    %3 = vector.load %arg2[%c64, %c0_4] : memref<328x128xf32, #tpu.memory_space<vmem>>, vector<32x64xf32>
    %c96 = arith.constant 96 : index
    %c0_5 = arith.constant 0 : index
    %4 = vector.load %arg2[%c96, %c0_5] : memref<328x128xf32, #tpu.memory_space<vmem>>, vector<64x32xf32>
    %c160 = arith.constant 160 : index
    %c0_6 = arith.constant 0 : index
    %5 = vector.load %arg2[%c160, %c0_6] : memref<328x128xf32, #tpu.memory_space<vmem>>, vector<16x128xf32>
    %c176 = arith.constant 176 : index
    %c0_7 = arith.constant 0 : index
    %6 = vector.load %arg2[%c176, %c0_7] : memref<328x128xf32, #tpu.memory_space<vmem>>, vector<128x16xf32>
    %c304 = arith.constant 304 : index
    %c0_8 = arith.constant 0 : index
    %7 = vector.load %arg2[%c304, %c0_8] : memref<328x128xf32, #tpu.memory_space<vmem>>, vector<8x128xf32>
    %c312 = arith.constant 312 : index
    %c0_9 = arith.constant 0 : index
    %8 = vector.load %arg2[%c312, %c0_9] : memref<328x128xf32, #tpu.memory_space<vmem>>, vector<16x16xf32>
    %c0_10 = arith.constant 0 : index
    %c0_11 = arith.constant 0 : index
    %9 = vector.load %arg3[%c0_10, %c0_11] : memref<8x128xf32, #tpu.memory_space<vmem>>, vector<1x96xf32>
    %c1 = arith.constant 1 : index
    %c0_12 = arith.constant 0 : index
    %10 = vector.load %arg3[%c1, %c0_12] : memref<8x128xf32, #tpu.memory_space<vmem>>, vector<1x32xf32>
    %c2 = arith.constant 2 : index
    %c0_13 = arith.constant 0 : index
    %11 = vector.load %arg3[%c2, %c0_13] : memref<8x128xf32, #tpu.memory_space<vmem>>, vector<1x64xf32>
    %c3 = arith.constant 3 : index
    %c0_14 = arith.constant 0 : index
    %12 = vector.load %arg3[%c3, %c0_14] : memref<8x128xf32, #tpu.memory_space<vmem>>, vector<1x32xf32>
    %c4 = arith.constant 4 : index
    %c0_15 = arith.constant 0 : index
    %13 = vector.load %arg3[%c4, %c0_15] : memref<8x128xf32, #tpu.memory_space<vmem>>, vector<1x32xf32>
    %c5 = arith.constant 5 : index
    %c0_16 = arith.constant 0 : index
    %14 = vector.load %arg3[%c5, %c0_16] : memref<8x128xf32, #tpu.memory_space<vmem>>, vector<1x32xf32>
    %c6 = arith.constant 6 : index
    %c0_17 = arith.constant 0 : index
    %15 = vector.load %arg3[%c6, %c0_17] : memref<8x128xf32, #tpu.memory_space<vmem>>, vector<1x32xf32>
    %c7 = arith.constant 7 : index
    %c0_18 = arith.constant 0 : index
    %16 = vector.load %arg3[%c7, %c0_18] : memref<8x128xf32, #tpu.memory_space<vmem>>, vector<1x32xf32>
    %cst = arith.constant dense<0.000000e+00> : vector<16x96xf32>
    %17 = tpu.matmul %0, %1, %cst {dimension_numbers = #tpu.dot_dimension_numbers<[1], [0], [0], [1], [0, 0, 1, 1], [], []>} : vector<16x32xf32>, vector<32x96xf32>, vector<16x96xf32> -> vector<16x96xf32>
    %18 = vector.broadcast %9 : vector<1x96xf32> to vector<16x96xf32>
    %19 = arith.addf %17, %18 : vector<16x96xf32>
    %20 = vector.extract_strided_slice %19 {offsets = [0, 0], sizes = [16, 32], strides = [1, 1]} : vector<16x96xf32> to vector<16x32xf32>
    %21 = vector.extract_strided_slice %19 {offsets = [0, 32], sizes = [16, 32], strides = [1, 1]} : vector<16x96xf32> to vector<16x32xf32>
    %22 = vector.extract_strided_slice %19 {offsets = [0, 64], sizes = [16, 32], strides = [1, 1]} : vector<16x96xf32> to vector<16x32xf32>
    %cst_19 = arith.constant dense<0.000000e+00> : vector<16x16xf32>
    %23 = tpu.matmul %20, %21, %cst_19 {dimension_numbers = #tpu.dot_dimension_numbers<[1], [1], [0], [0], [0, 0, 1, 0], [], []>} : vector<16x32xf32>, vector<16x32xf32>, vector<16x16xf32> -> vector<16x16xf32>
    %cst_20 = arith.constant 6.250000e-02 : f32
    %24 = vector.broadcast %cst_20 : f32 to vector<16x16xf32>
    %25 = arith.mulf %23, %24 : vector<16x16xf32>
    %26 = vector.extract_strided_slice %0 {offsets = [0, 0], sizes = [16, 8], strides = [1, 1]} : vector<16x32xf32> to vector<16x8xf32>
    %27 = math.tanh %26 : vector<16x8xf32>
    %28 = math.exp %27 : vector<16x8xf32>
    %cst_21 = arith.constant dense<0.000000e+00> : vector<16xf32>
    %29 = vector.multi_reduction <add>, %28, %cst_21 [1] : vector<16x8xf32> to vector<16xf32>
    %30 = vector.shape_cast %29 : vector<16xf32> to vector<16x1xf32>
    %31 = tpu.transpose %30, [1, 0] : vector<16x1xf32> -> vector<1x16xf32>
    %32 = vector.broadcast %30 : vector<16x1xf32> to vector<16x16xf32>
    %33 = vector.broadcast %31 : vector<1x16xf32> to vector<16x16xf32>
    %34 = arith.addf %32, %33 : vector<16x16xf32>
    %cst_22 = arith.constant dense<0.000000e+00> : vector<16x128xf32>
    %35 = tpu.matmul %34, %5, %cst_22 {dimension_numbers = #tpu.dot_dimension_numbers<[1], [0], [0], [1], [0, 0, 1, 1], [], []>} : vector<16x16xf32>, vector<16x128xf32>, vector<16x128xf32> -> vector<16x128xf32>
    %cst_23 = arith.constant dense<0.000000e+00> : vector<16x128xf32>
    %36 = tpu.matmul %28, %7, %cst_23 {dimension_numbers = #tpu.dot_dimension_numbers<[1], [0], [0], [1], [0, 0, 1, 1], [], []>} : vector<16x8xf32>, vector<8x128xf32>, vector<16x128xf32> -> vector<16x128xf32>
    %37 = arith.divf %36, %35 : vector<16x128xf32>
    %cst_24 = arith.constant 9.99999993E-9 : f32
    %38 = vector.broadcast %cst_24 : f32 to vector<16x128xf32>
    %39 = arith.addf %37, %38 : vector<16x128xf32>
    %40 = math.log %39 : vector<16x128xf32>
    %41 = arith.mulf %37, %40 : vector<16x128xf32>
    %cst_25 = arith.constant dense<0.000000e+00> : vector<16x16xf32>
    %42 = tpu.matmul %41, %6, %cst_25 {dimension_numbers = #tpu.dot_dimension_numbers<[1], [0], [0], [1], [0, 0, 1, 1], [], []>} : vector<16x128xf32>, vector<128x16xf32>, vector<16x16xf32> -> vector<16x16xf32>
    %43 = tpu.transpose %42, [1, 0] : vector<16x16xf32> -> vector<16x16xf32>
    %44 = arith.addf %42, %43 : vector<16x16xf32>
    %cst_26 = arith.constant 0.000000e+00 : f32
    %45 = vector.broadcast %cst_26 : f32 to vector<16x16xf32>
    %46 = arith.subf %45, %44 : vector<16x16xf32>
    %cst_27 = arith.constant 0.699999988 : f32
    %47 = vector.broadcast %cst_27 : f32 to vector<16x16xf32>
    %48 = arith.mulf %47, %25 : vector<16x16xf32>
    %cst_28 = arith.constant 3.000000e-01 : f32
    %49 = vector.broadcast %cst_28 : f32 to vector<16x16xf32>
    %50 = arith.mulf %49, %46 : vector<16x16xf32>
    %51 = arith.addf %48, %50 : vector<16x16xf32>
    %52 = arith.addf %51, %8 : vector<16x16xf32>
    %cst_29 = arith.constant dense<0xFF800000> : vector<16xf32>
    %53 = vector.multi_reduction <maximumf>, %52, %cst_29 [1] : vector<16x16xf32> to vector<16xf32>
    %54 = vector.shape_cast %53 : vector<16xf32> to vector<16x1xf32>
    %55 = vector.broadcast %54 : vector<16x1xf32> to vector<16x16xf32>
    %56 = arith.subf %52, %55 : vector<16x16xf32>
    %57 = math.exp %56 : vector<16x16xf32>
    %cst_30 = arith.constant dense<0.000000e+00> : vector<16xf32>
    %58 = vector.multi_reduction <add>, %57, %cst_30 [1] : vector<16x16xf32> to vector<16xf32>
    %59 = vector.shape_cast %58 : vector<16xf32> to vector<16x1xf32>
    %60 = vector.broadcast %59 : vector<16x1xf32> to vector<16x16xf32>
    %61 = arith.divf %57, %60 : vector<16x16xf32>
    %cst_31 = arith.constant dense<0.000000e+00> : vector<16x32xf32>
    %62 = tpu.matmul %61, %22, %cst_31 {dimension_numbers = #tpu.dot_dimension_numbers<[1], [0], [0], [1], [0, 0, 1, 1], [], []>} : vector<16x16xf32>, vector<16x32xf32>, vector<16x32xf32> -> vector<16x32xf32>
    %cst_32 = arith.constant dense<0.000000e+00> : vector<16x32xf32>
    %63 = tpu.matmul %62, %2, %cst_32 {dimension_numbers = #tpu.dot_dimension_numbers<[1], [0], [0], [1], [0, 0, 1, 1], [], []>} : vector<16x32xf32>, vector<32x32xf32>, vector<16x32xf32> -> vector<16x32xf32>
    %64 = vector.broadcast %10 : vector<1x32xf32> to vector<16x32xf32>
    %65 = arith.addf %63, %64 : vector<16x32xf32>
    %66 = arith.addf %0, %65 : vector<16x32xf32>
    %cst_33 = arith.constant dense<0.000000e+00> : vector<16xf32>
    %67 = vector.multi_reduction <add>, %66, %cst_33 [1] : vector<16x32xf32> to vector<16xf32>
    %68 = vector.shape_cast %67 : vector<16xf32> to vector<16x1xf32>
    %cst_34 = arith.constant 3.200000e+01 : f32
    %69 = vector.broadcast %cst_34 : f32 to vector<16x1xf32>
    %70 = arith.divf %68, %69 : vector<16x1xf32>
    %71 = vector.broadcast %70 : vector<16x1xf32> to vector<16x32xf32>
    %72 = arith.subf %66, %71 : vector<16x32xf32>
    %73 = arith.mulf %72, %72 : vector<16x32xf32>
    %cst_35 = arith.constant dense<0.000000e+00> : vector<16xf32>
    %74 = vector.multi_reduction <add>, %73, %cst_35 [1] : vector<16x32xf32> to vector<16xf32>
    %75 = vector.shape_cast %74 : vector<16xf32> to vector<16x1xf32>
    %cst_36 = arith.constant 3.200000e+01 : f32
    %76 = vector.broadcast %cst_36 : f32 to vector<16x1xf32>
    %77 = arith.divf %75, %76 : vector<16x1xf32>
    %cst_37 = arith.constant 9.99999974E-6 : f32
    %78 = vector.broadcast %cst_37 : f32 to vector<16x1xf32>
    %79 = arith.addf %77, %78 : vector<16x1xf32>
    %80 = math.rsqrt %79 : vector<16x1xf32>
    %81 = vector.broadcast %80 : vector<16x1xf32> to vector<16x32xf32>
    %82 = arith.mulf %72, %81 : vector<16x32xf32>
    %83 = vector.broadcast %13 : vector<1x32xf32> to vector<16x32xf32>
    %84 = arith.mulf %82, %83 : vector<16x32xf32>
    %85 = vector.broadcast %14 : vector<1x32xf32> to vector<16x32xf32>
    %86 = arith.addf %84, %85 : vector<16x32xf32>
    %cst_38 = arith.constant dense<0.000000e+00> : vector<16x64xf32>
    %87 = tpu.matmul %86, %3, %cst_38 {dimension_numbers = #tpu.dot_dimension_numbers<[1], [0], [0], [1], [0, 0, 1, 1], [], []>} : vector<16x32xf32>, vector<32x64xf32>, vector<16x64xf32> -> vector<16x64xf32>
    %88 = vector.broadcast %11 : vector<1x64xf32> to vector<16x64xf32>
    %89 = arith.addf %87, %88 : vector<16x64xf32>
    %cst_39 = arith.constant 0.000000e+00 : f32
    %90 = vector.broadcast %cst_39 : f32 to vector<16x64xf32>
    %91 = arith.maximumf %89, %90 : vector<16x64xf32>
    %cst_40 = arith.constant dense<0.000000e+00> : vector<16x32xf32>
    %92 = tpu.matmul %91, %4, %cst_40 {dimension_numbers = #tpu.dot_dimension_numbers<[1], [0], [0], [1], [0, 0, 1, 1], [], []>} : vector<16x64xf32>, vector<64x32xf32>, vector<16x32xf32> -> vector<16x32xf32>
    %93 = vector.broadcast %12 : vector<1x32xf32> to vector<16x32xf32>
    %94 = arith.addf %92, %93 : vector<16x32xf32>
    %95 = arith.addf %86, %94 : vector<16x32xf32>
    %cst_41 = arith.constant dense<0.000000e+00> : vector<16xf32>
    %96 = vector.multi_reduction <add>, %95, %cst_41 [1] : vector<16x32xf32> to vector<16xf32>
    %97 = vector.shape_cast %96 : vector<16xf32> to vector<16x1xf32>
    %cst_42 = arith.constant 3.200000e+01 : f32
    %98 = vector.broadcast %cst_42 : f32 to vector<16x1xf32>
    %99 = arith.divf %97, %98 : vector<16x1xf32>
    %100 = vector.broadcast %99 : vector<16x1xf32> to vector<16x32xf32>
    %101 = arith.subf %95, %100 : vector<16x32xf32>
    %102 = arith.mulf %101, %101 : vector<16x32xf32>
    %cst_43 = arith.constant dense<0.000000e+00> : vector<16xf32>
    %103 = vector.multi_reduction <add>, %102, %cst_43 [1] : vector<16x32xf32> to vector<16xf32>
    %104 = vector.shape_cast %103 : vector<16xf32> to vector<16x1xf32>
    %cst_44 = arith.constant 3.200000e+01 : f32
    %105 = vector.broadcast %cst_44 : f32 to vector<16x1xf32>
    %106 = arith.divf %104, %105 : vector<16x1xf32>
    %cst_45 = arith.constant 9.99999974E-6 : f32
    %107 = vector.broadcast %cst_45 : f32 to vector<16x1xf32>
    %108 = arith.addf %106, %107 : vector<16x1xf32>
    %109 = math.rsqrt %108 : vector<16x1xf32>
    %110 = vector.broadcast %109 : vector<16x1xf32> to vector<16x32xf32>
    %111 = arith.mulf %101, %110 : vector<16x32xf32>
    %112 = vector.broadcast %15 : vector<1x32xf32> to vector<16x32xf32>
    %113 = arith.mulf %111, %112 : vector<16x32xf32>
    %114 = vector.broadcast %16 : vector<1x32xf32> to vector<16x32xf32>
    %115 = arith.addf %113, %114 : vector<16x32xf32>
    %c0_46 = arith.constant 0 : index
    %c0_47 = arith.constant 0 : index
    %116 = vector.load %arg4[%c0_46, %c0_47] : memref<16x32xf32, #tpu.memory_space<vmem>>, vector<16x32xf32>
    tpu.vector_store %arg4[%c0_46, %c0_47], %115 {strides = array<i32>} : memref<16x32xf32, #tpu.memory_space<vmem>>, vector<16x32xf32>,
    return
  }
  func.func @transform_0(%arg0: i32) -> (i32, i32) {
    %c0_i32 = arith.constant 0 : i32
    %c0_i32_0 = arith.constant 0 : i32
    %c0_i32_1 = arith.constant 0 : i32
    return %c0_i32, %c0_i32_0 : i32, i32
  }
  func.func @transform_1(%arg0: i32) -> (i32, i32) {
    %c0_i32 = arith.constant 0 : i32
    %c0_i32_0 = arith.constant 0 : i32
    %c0_i32_1 = arith.constant 0 : i32
    return %c0_i32, %c0_i32_0 : i32, i32
  }
  func.func @transform_2(%arg0: i32) -> (i32, i32) {
    %c0_i32 = arith.constant 0 : i32
    %c0_i32_0 = arith.constant 0 : i32
    %c0_i32_1 = arith.constant 0 : i32
    return %c0_i32, %c0_i32_0 : i32, i32
  }
  func.func @transform_3(%arg0: i32) -> (i32, i32) {
    %c0_i32 = arith.constant 0 : i32
    %c0_i32_0 = arith.constant 0 : i32
    %c0_i32_1 = arith.constant 0 : i32
    return %c0_i32, %c0_i32_0 : i32, i32
  }
}

</mosaic_0001>

<llo_original>
// kernel: quantum_transformer_block.1
$region0: #{quantum_transformer_block.1}
  #allocation0 [shape = 'u32[]', space=smem, size = 0x4, offset = 0x4, fixed_abs, tag = 'smem constant byte address 0x4 - core index']
  #allocation1 [shape = 'u32[144,128]{1,0:T(1,128)}', space=vmem, size = 0x12000, scoped, tag = 'internal scratch']
  %s0 = inlined_call_operand.vmem [shape: f32[16,32], index: 0, kind: input, shape index: {}]
  %s1 = inlined_call_operand.vmem [shape: f32[328,128], index: 1, kind: input, shape index: {}]
  %s2 = inlined_call_operand.vmem [shape: f32[8,128], index: 2, kind: input, shape index: {}]
  %s3 = inlined_call_operand.hbm [shape: f32[16,32], index: 3, kind: output, shape index: {}]
  %s4 = sld [smem:[#allocation0]]
  $region22: #{quantum_transformer_block.1} parent=0
    _
  %s6 = ssub.s32 1, %s4
  %s7 = scalar_select 0, %s6, %s4
  $region1: #{quantum_transformer_block.1} parent=0
    #allocation2 [shape = 'u8[8192]{0}', space=vmem, size = 0x2000, scoped, tag = 'output window, operand 0, single buffered']
    #allocation3 [shape = 's32[1]{0}', space=sflag, size = 0x4, scoped, tag = 'scoped memory for quantum_transformer_block.1']
    %8 = vsyncpa [#allocation3], 0
    // Predicated region
    $region2: #{quantum_transformer_block.1} parent=1 // pred_check
      _
    $region3: #{quantum_transformer_block.1} parent=1 // pred_check_branch
      %10 = sbr.rel (0) target = $region5
    $region4: #{quantum_transformer_block.1} parent=1 // pred_region
      _
    $region5: #{quantum_transformer_block.1} parent=1 // pred_fallthru
      _
    // Predicated region
    $region6: #{quantum_transformer_block.1} parent=1 // pred_check
      _
    $region7: #{quantum_transformer_block.1} parent=1 // pred_check_branch
      %12 = sbr.rel (0) target = $region9
    $region8: #{quantum_transformer_block.1} parent=1 // pred_region
      _
    $region9: #{quantum_transformer_block.1} parent=1 // pred_fallthru
      _
    // Predicated region
    $region10: #{quantum_transformer_block.1} parent=1 // pred_check
      _
    $region11: #{quantum_transformer_block.1} parent=1 // pred_check_branch
      %14 = sbr.rel (0) target = $region13
    $region12: #{quantum_transformer_block.1} parent=1 // pred_region
      _
    $region13: #{quantum_transformer_block.1} parent=1 // pred_fallthru
      _
    %v15 = vld [vmem:[%s0] sm:$0xff]
    %v16 = vld [vmem:[%s0 + $0x8] sm:$0xff]
    %v17 = vld [vmem:[%s1] sm:$0xff]
    %v18 = vld [vmem:[%s1 + $0x8] sm:$0xff]
    %v19 = vld [vmem:[%s1 + $0x10] sm:$0xff]
    %v20 = vld [vmem:[%s1 + $0x18] sm:$0xff]
    %v21 = vld [vmem:[%s1 + $0x20] sm:$0xff]
    %v22 = vld [vmem:[%s1 + $0x28] sm:$0xff]
    %v23 = vld [vmem:[%s1 + $0x30] sm:$0xff]
    %v24 = vld [vmem:[%s1 + $0x38] sm:$0xff]
    %v25 = vld [vmem:[%s1 + $0x40] sm:$0xff]
    %v26 = vld [vmem:[%s1 + $0x48] sm:$0xff]
    %v27 = vld [vmem:[%s1 + $0x50] sm:$0xff]
    %v28 = vld [vmem:[%s1 + $0x58] sm:$0xff]
    %v29 = vld [vmem:[%s1 + $0x60] sm:$0xff]
    %v30 = vld [vmem:[%s1 + $0x68] sm:$0xff]
    %v31 = vld [vmem:[%s1 + $0x70] sm:$0xff]
    %v32 = vld [vmem:[%s1 + $0x78] sm:$0xff]
    %v33 = vld [vmem:[%s1 + $0x80] sm:$0xff]
    %v34 = vld [vmem:[%s1 + $0x88] sm:$0xff]
    %v35 = vld [vmem:[%s1 + $0x90] sm:$0xff]
    %v36 = vld [vmem:[%s1 + $0x98] sm:$0xff]
    %v37 = vld [vmem:[%s1 + $0xa0] sm:$0xff]
    %v38 = vld [vmem:[%s1 + $0xa8] sm:$0xff]
    %v39 = vld [vmem:[%s1 + $0xb0] sm:$0xff]
    %v40 = vld [vmem:[%s1 + $0xb8] sm:$0xff]
    %v41 = vld [vmem:[%s1 + $0xc0] sm:$0xff]
    %v42 = vld [vmem:[%s1 + $0xc8] sm:$0xff]
    %v43 = vld [vmem:[%s1 + $0xd0] sm:$0xff]
    %v44 = vld [vmem:[%s1 + $0xd8] sm:$0xff]
    %v45 = vld [vmem:[%s1 + $0xe0] sm:$0xff]
    %v46 = vld [vmem:[%s1 + $0xe8] sm:$0xff]
    %v47 = vld [vmem:[%s1 + $0xf0] sm:$0xff]
    %v48 = vld [vmem:[%s1 + $0xf8] sm:$0xff]
    %v49 = vld [vmem:[%s1 + $0x100] sm:$0xff]
    %v50 = vld [vmem:[%s1 + $0x108] sm:$0xff]
    %v51 = vld [vmem:[%s1 + $0x110] sm:$0xff]
    %v52 = vld [vmem:[%s1 + $0x118] sm:$0xff]
    %v53 = vld [vmem:[%s1 + $0x120] sm:$0xff]
    %v54 = vld [vmem:[%s1 + $0x128] sm:$0xff]
    %v55 = vld [vmem:[%s1 + $0x130] sm:$0xff]
    %v56 = vld [vmem:[%s1 + $0x138] sm:$0xff]
    %v57 = vld [vmem:[%s1 + $0x140] sm:$0xff]
    %v58 = vld [vmem:[%s2] sm:$0x1]
    %v59 = vld [vmem:[%s2 + $0x1] sm:$0x1]
    %v60 = vld [vmem:[%s2 + $0x2] sm:$0x1]
    %v61 = vld [vmem:[%s2 + $0x3] sm:$0x1]
    %v62 = vld [vmem:[%s2 + $0x4] sm:$0x1]
    %v63 = vld [vmem:[%s2 + $0x5] sm:$0x1]
    %v64 = vld [vmem:[%s2 + $0x6] sm:$0x1]
    %v65 = vld [vmem:[%s2 + $0x7] sm:$0x1]
    %v66 = vlaneseq
    %v67 = vshrl.u32 %v66, 7
    %v68 = vsub.s32 0, %v67
    %v69 = vrot.slane %v58, %v68
    %vm70 = vcmask 261120
    %v72 = vsel %vm70, %v15, 0
    %v75 = vsel %vm70, %v16, 0
    %77 = vmatprep.subr.mxu0 0.0
    %78 = vmatpush1.msra.mxu0 0.0
    %79 = vmatprep.subr.mxu0 0.0
    %80 = vmatpush1.msra.mxu0 0.0
    %81 = vmatprep.subr.mxu0 0.0
    %82 = vmatpush1.msra.mxu0 0.0
    %83 = vmatprep.subr.mxu0 0.0
    %84 = vmatpush1.msra.mxu0 0.0
    %85 = vmatprep.subr.mxu0 0.0
    %86 = vmatpush1.msra.mxu0 0.0
    %87 = vmatprep.subr.mxu0 0.0
    %88 = vmatpush1.msra.mxu0 0.0
    %89 = vmatprep.subr.mxu0 0.0
    %90 = vmatpush1.msra.mxu0 0.0
    %91 = vmatprep.subr.mxu0 0.0
    %92 = vmatpush1.msra.mxu0 0.0
    %93 = vmatprep.subr.mxu0 0.0
    %94 = vmatpush1.msra.mxu0 0.0
    %95 = vmatprep.subr.mxu0 0.0
    %96 = vmatpush1.msra.mxu0 0.0
    %97 = vmatprep.subr.mxu0 0.0
    %98 = vmatpush1.msra.mxu0 0.0
    %99 = vmatprep.subr.mxu0 0.0
    %100 = vmatpush1.msra.mxu0 0.0
    %101 = vmatprep.subr.mxu0 0.0
    %102 = vmatpush1.msra.mxu0 %v20
    %103 = vmatprep.subr.mxu0 0.0
    %104 = vmatpush1.msra.mxu0 %v19
    %105 = vmatprep.subr.mxu0 0.0
    %106 = vmatpush1.msra.mxu0 %v18
    %107 = vmatprep.subr.mxu0 0.0
    %108 = vmatpush1.msra.mxu0 %v17
    %109 = vmatprep.subr.mxu0 0.0
    %110 = vmatpush2.msra.mxu0 0.0
    %111 = vmatprep.subr.mxu0 0.0
    %112 = vmatpush2.msra.mxu0 0.0
    %113 = vmatprep.subr.mxu0 0.0
    %114 = vmatpush2.msra.mxu0 0.0
    %115 = vmatprep.subr.mxu0 0.0
    %116 = vmatpush2.msra.mxu0 0.0
    %117 = vmatprep.subr.mxu0 0.0
    %118 = vmatpush2.msra.mxu0 0.0
    %119 = vmatprep.subr.mxu0 0.0
    %120 = vmatpush2.msra.mxu0 0.0
    %121 = vmatprep.subr.mxu0 0.0
    %122 = vmatpush2.msra.mxu0 0.0
    %123 = vmatprep.subr.mxu0 0.0
    %124 = vmatpush2.msra.mxu0 0.0
    %125 = vmatprep.subr.mxu0 0.0
    %126 = vmatpush2.msra.mxu0 0.0
    %127 = vmatprep.subr.mxu0 0.0
    %128 = vmatpush2.msra.mxu0 0.0
    %129 = vmatprep.subr.mxu0 0.0
    %130 = vmatpush2.msra.mxu0 0.0
    %131 = vmatprep.subr.mxu0 0.0
    %132 = vmatpush2.msra.mxu0 0.0
    %133 = vmatprep.subr.mxu0 0.0
    %134 = vmatpush2.msra.mxu0 0.0
    %135 = vmatprep.subr.mxu0 0.0
    %136 = vmatpush2.msra.mxu0 0.0
    %137 = vmatprep.subr.mxu0 0.0
    %138 = vmatpush2.msra.mxu0 0.0
    %139 = vmatprep.subr.mxu0 0.0
    %140 = vmatpush2.msra.mxu0 0.0
    %141 = vmatprep.mubr.f32.mxu0 0.0
    %142 = vmatmul.mubr.f32.gmra.mxu0 %v72
    %v143 = vpop.f32.mrf.mxu0
    %v144 = vadd.f32 %v69, %v143
    %v145 = vpop.f32.mrf.mxu0
    %146 = vmatprep.mubr.f32.mxu0 0.0
    %147 = vmatmul.mubr.f32.gmra.mxu0 %v75
    %v148 = vpop.f32.mrf.mxu0
    %v149 = vadd.f32 %v69, %v148
    %v150 = vpop.f32.mrf.mxu0
    %151 = vdwg.mxu0
    %154 = vrot.lane.b32.xlu0 %v144, 96
    %v155 = vpop.permute.xlu0 %154
    %156 = vrot.lane.b32.xlu0 %v149, 96
    %v157 = vpop.permute.xlu0 %156
    %v158 = vsel %vm70, %v144, 0
    %v160 = vsel %vm70, %v149, 0
    %v162 = vsel %vm70, %v155, 0
    %v164 = vsel %vm70, %v157, 0
    %166 = vmatprep.subr.mxu0 0.0
    %167 = vmatpush1.xpose.msra.mxu0 0.0
    %168 = vmatprep.subr.mxu0 0.0
    %169 = vmatpush1.xpose.msra.mxu0 0.0
    %170 = vmatprep.subr.mxu0 0.0
    %171 = vmatpush1.xpose.msra.mxu0 0.0
    %172 = vmatprep.subr.mxu0 0.0
    %173 = vmatpush1.xpose.msra.mxu0 0.0
    %174 = vmatprep.subr.mxu0 0.0
    %175 = vmatpush1.xpose.msra.mxu0 0.0
    %176 = vmatprep.subr.mxu0 0.0
    %177 = vmatpush1.xpose.msra.mxu0 0.0
    %178 = vmatprep.subr.mxu0 0.0
    %179 = vmatpush1.xpose.msra.mxu0 0.0
    %180 = vmatprep.subr.mxu0 0.0
    %181 = vmatpush1.xpose.msra.mxu0 0.0
    %182 = vmatprep.subr.mxu0 0.0
    %183 = vmatpush1.xpose.msra.mxu0 0.0
    %184 = vmatprep.subr.mxu0 0.0
    %185 = vmatpush1.xpose.msra.mxu0 0.0
    %186 = vmatprep.subr.mxu0 0.0
    %187 = vmatpush1.xpose.msra.mxu0 0.0
    %188 = vmatprep.subr.mxu0 0.0
    %189 = vmatpush1.xpose.msra.mxu0 0.0
    %190 = vmatprep.subr.mxu0 0.0
    %191 = vmatpush1.xpose.msra.mxu0 0.0
    %192 = vmatprep.subr.mxu0 0.0
    %193 = vmatpush1.xpose.msra.mxu0 0.0
    %194 = vmatprep.subr.mxu0 0.0
    %195 = vmatpush1.xpose.msra.mxu0 %v164
    %196 = vmatprep.subr.mxu0 0.0
    %197 = vmatpush1.xpose.msra.mxu0 %v162
    %198 = vmatprep.subr.mxu0 0.0
    %199 = vmatpush2.xpose.msra.mxu0 0.0
    %200 = vmatprep.subr.mxu0 0.0
    %201 = vmatpush2.xpose.msra.mxu0 0.0
    %202 = vmatprep.subr.mxu0 0.0
    %203 = vmatpush2.xpose.msra.mxu0 0.0
    %204 = vmatprep.subr.mxu0 0.0
    %205 = vmatpush2.xpose.msra.mxu0 0.0
    %206 = vmatprep.subr.mxu0 0.0
    %207 = vmatpush2.xpose.msra.mxu0 0.0
    %208 = vmatprep.subr.mxu0 0.0
    %209 = vmatpush2.xpose.msra.mxu0 0.0
    %210 = vmatprep.subr.mxu0 0.0
    %211 = vmatpush2.xpose.msra.mxu0 0.0
    %212 = vmatprep.subr.mxu0 0.0
    %213 = vmatpush2.xpose.msra.mxu0 0.0
    %214 = vmatprep.subr.mxu0 0.0
    %215 = vmatpush2.xpose.msra.mxu0 0.0
    %216 = vmatprep.subr.mxu0 0.0
    %217 = vmatpush2.xpose.msra.mxu0 0.0
    %218 = vmatprep.subr.mxu0 0.0
    %219 = vmatpush2.xpose.msra.mxu0 0.0
    %220 = vmatprep.subr.mxu0 0.0
    %221 = vmatpush2.xpose.msra.mxu0 0.0
    %222 = vmatprep.subr.mxu0 0.0
    %223 = vmatpush2.xpose.msra.mxu0 0.0
    %224 = vmatprep.subr.mxu0 0.0
    %225 = vmatpush2.xpose.msra.mxu0 0.0
    %226 = vmatprep.subr.mxu0 0.0
    %227 = vmatpush2.xpose.msra.mxu0 0.0
    %228 = vmatprep.subr.mxu0 0.0
    %229 = vmatpush2.xpose.msra.mxu0 0.0
    %230 = vmatprep.mubr.f32.mxu0 0.0
    %231 = vmatmul.mubr.f32.gmra.mxu0 %v158
    %v232 = vpop.f32.mrf.mxu0
    %v233 = vadd.f32 0.0, %v232
    %v234 = vpop.f32.mrf.mxu0
    %235 = vmatprep.mubr.f32.mxu0 0.0
    %236 = vmatmul.mubr.f32.gmra.mxu0 %v160
    %v237 = vpop.f32.mrf.mxu0
    %v238 = vadd.f32 0.0, %v237
    %v239 = vpop.f32.mrf.mxu0
    %240 = vdwg.mxu0
    %v241 = vmul.f32 %v233, 0.0625
    %v242 = vmul.f32 %v238, 0.0625
    %v243 = vtanh.pop %v15
    %v244 = vtanh.pop %v16
    %v245 = vmul.f32 %v243, 1.442695
    %v246 = vpow.pop %v245
    %v247 = vmul.f32 %v244, 1.442695
    %v248 = vpow.pop %v247
    %vm249 = vcmask 64512
    %v250 = vsel %vm249, %v246, 0.0
    %251 = vadd.xlane.f32.xlu0 %v250
    %v252 = vpop.xlane.xlu0 %251
    %v253 = vsel %vm249, %v248, 0.0
    %254 = vadd.xlane.f32.xlu0 %v253
    %v255 = vpop.xlane.xlu0 %254
    %256 = vxpose.xlu0.b32.start [1/16] %v252, 128
    %257 = vxpose.xlu0.b32.cont [2/16] %v255, 128
    %258 = vxpose.xlu0.b32.cont [3/16] 0.0, 128
    %259 = vxpose.xlu0.b32.cont [4/16] 0.0, 128
    %260 = vxpose.xlu0.b32.cont [5/16] 0.0, 128
    %261 = vxpose.xlu0.b32.cont [6/16] 0.0, 128
    %262 = vxpose.xlu0.b32.cont [7/16] 0.0, 128
    %263 = vxpose.xlu0.b32.cont [8/16] 0.0, 128
    %264 = vxpose.xlu0.b32.cont [9/16] 0.0, 128
    %265 = vxpose.xlu0.b32.cont [10/16] 0.0, 128
    %266 = vxpose.xlu0.b32.cont [11/16] 0.0, 128
    %267 = vxpose.xlu0.b32.cont [12/16] 0.0, 128
    %268 = vxpose.xlu0.b32.cont [13/16] 0.0, 128
    %269 = vxpose.xlu0.b32.cont [14/16] 0.0, 128
    %270 = vxpose.xlu0.b32.cont [15/16] 0.0, 128
    %271 = vxpose.xlu0.b32.end [16/16] 0.0, 128
    %v272 = vpop.trf.xlu0
    %v273 = vpop.trf.xlu0
    %v274 = vpop.trf.xlu0
    %v275 = vpop.trf.xlu0
    %v276 = vpop.trf.xlu0
    %v277 = vpop.trf.xlu0
    %v278 = vpop.trf.xlu0
    %v279 = vpop.trf.xlu0
    %v280 = vpop.trf.xlu0
    %v281 = vpop.trf.xlu0
    %v282 = vpop.trf.xlu0
    %v283 = vpop.trf.xlu0
    %v284 = vpop.trf.xlu0
    %v285 = vpop.trf.xlu0
    %v286 = vpop.trf.xlu0
    %v287 = vpop.trf.xlu0
    %v288 = vlaneseq
    %v289 = vshrl.u32 %v288, 7
    %v290 = vsub.s32 0, %v289
    %v291 = vrot.slane %v272, %v290
    %v292 = vadd.f32 %v252, %v291
    %v293 = vadd.f32 %v255, %v291
    %vm294 = vcmask 130048
    %v296 = vsel %vm294, %v292, 0
    %v299 = vsel %vm294, %v293, 0
    %301 = vmatprep.subr.mxu0 0.0
    %302 = vmatpush1.msra.mxu0 0.0
    %303 = vmatprep.subr.mxu0 0.0
    %304 = vmatpush1.msra.mxu0 0.0
    %305 = vmatprep.subr.mxu0 0.0
    %306 = vmatpush1.msra.mxu0 0.0
    %307 = vmatprep.subr.mxu0 0.0
    %308 = vmatpush1.msra.mxu0 0.0
    %309 = vmatprep.subr.mxu0 0.0
    %310 = vmatpush1.msra.mxu0 0.0
    %311 = vmatprep.subr.mxu0 0.0
    %312 = vmatpush1.msra.mxu0 0.0
    %313 = vmatprep.subr.mxu0 0.0
    %314 = vmatpush1.msra.mxu0 0.0
    %315 = vmatprep.subr.mxu0 0.0
    %316 = vmatpush1.msra.mxu0 0.0
    %317 = vmatprep.subr.mxu0 0.0
    %318 = vmatpush1.msra.mxu0 0.0
    %319 = vmatprep.subr.mxu0 0.0
    %320 = vmatpush1.msra.mxu0 0.0
    %321 = vmatprep.subr.mxu0 0.0
    %322 = vmatpush1.msra.mxu0 0.0
    %323 = vmatprep.subr.mxu0 0.0
    %324 = vmatpush1.msra.mxu0 0.0
    %325 = vmatprep.subr.mxu0 0.0
    %326 = vmatpush1.msra.mxu0 0.0
    %327 = vmatprep.subr.mxu0 0.0
    %328 = vmatpush1.msra.mxu0 0.0
    %329 = vmatprep.subr.mxu0 0.0
    %330 = vmatpush1.msra.mxu0 %v38
    %331 = vmatprep.subr.mxu0 0.0
    %332 = vmatpush1.msra.mxu0 %v37
    %333 = vmatprep.subr.mxu0 0.0
    %334 = vmatpush2.msra.mxu0 0.0
    %335 = vmatprep.subr.mxu0 0.0
    %336 = vmatpush2.msra.mxu0 0.0
    %337 = vmatprep.subr.mxu0 0.0
    %338 = vmatpush2.msra.mxu0 0.0
    %339 = vmatprep.subr.mxu0 0.0
    %340 = vmatpush2.msra.mxu0 0.0
    %341 = vmatprep.subr.mxu0 0.0
    %342 = vmatpush2.msra.mxu0 0.0
    %343 = vmatprep.subr.mxu0 0.0
    %344 = vmatpush2.msra.mxu0 0.0
    %345 = vmatprep.subr.mxu0 0.0
    %346 = vmatpush2.msra.mxu0 0.0
    %347 = vmatprep.subr.mxu0 0.0
    %348 = vmatpush2.msra.mxu0 0.0
    %349 = vmatprep.subr.mxu0 0.0
    %350 = vmatpush2.msra.mxu0 0.0
    %351 = vmatprep.subr.mxu0 0.0
    %352 = vmatpush2.msra.mxu0 0.0
    %353 = vmatprep.subr.mxu0 0.0
    %354 = vmatpush2.msra.mxu0 0.0
    %355 = vmatprep.subr.mxu0 0.0
    %356 = vmatpush2.msra.mxu0 0.0
    %357 = vmatprep.subr.mxu0 0.0
    %358 = vmatpush2.msra.mxu0 0.0
    %359 = vmatprep.subr.mxu0 0.0
    %360 = vmatpush2.msra.mxu0 0.0
    %361 = vmatprep.subr.mxu0 0.0
    %362 = vmatpush2.msra.mxu0 0.0
    %363 = vmatprep.subr.mxu0 0.0
    %364 = vmatpush2.msra.mxu0 0.0
    %365 = vmatprep.mubr.f32.mxu0 0.0
    %366 = vmatmul.mubr.f32.gmra.mxu0 %v296
    %v367 = vpop.f32.mrf.mxu0
    %v368 = vadd.f32 0.0, %v367
    %v369 = vpop.f32.mrf.mxu0
    %370 = vmatprep.mubr.f32.mxu0 0.0
    %371 = vmatmul.mubr.f32.gmra.mxu0 %v299
    %v372 = vpop.f32.mrf.mxu0
    %v373 = vadd.f32 0.0, %v372
    %v374 = vpop.f32.mrf.mxu0
    %375 = vdwg.mxu0
    %v377 = vsel %vm249, %v246, 0
    %v380 = vsel %vm249, %v248, 0
    %382 = vmatprep.subr.mxu0 0.0
    %383 = vmatpush1.msra.mxu0 0.0
    %384 = vmatprep.subr.mxu0 0.0
    %385 = vmatpush1.msra.mxu0 0.0
    %386 = vmatprep.subr.mxu0 0.0
    %387 = vmatpush1.msra.mxu0 0.0
    %388 = vmatprep.subr.mxu0 0.0
    %389 = vmatpush1.msra.mxu0 0.0
    %390 = vmatprep.subr.mxu0 0.0
    %391 = vmatpush1.msra.mxu0 0.0
    %392 = vmatprep.subr.mxu0 0.0
    %393 = vmatpush1.msra.mxu0 0.0
    %394 = vmatprep.subr.mxu0 0.0
    %395 = vmatpush1.msra.mxu0 0.0
    %396 = vmatprep.subr.mxu0 0.0
    %397 = vmatpush1.msra.mxu0 0.0
    %398 = vmatprep.subr.mxu0 0.0
    %399 = vmatpush1.msra.mxu0 0.0
    %400 = vmatprep.subr.mxu0 0.0
    %401 = vmatpush1.msra.mxu0 0.0
    %402 = vmatprep.subr.mxu0 0.0
    %403 = vmatpush1.msra.mxu0 0.0
    %404 = vmatprep.subr.mxu0 0.0
    %405 = vmatpush1.msra.mxu0 0.0
    %406 = vmatprep.subr.mxu0 0.0
    %407 = vmatpush1.msra.mxu0 0.0
    %408 = vmatprep.subr.mxu0 0.0
    %409 = vmatpush1.msra.mxu0 0.0
    %410 = vmatprep.subr.mxu0 0.0
    %411 = vmatpush1.msra.mxu0 0.0
    %412 = vmatprep.subr.mxu0 0.0
    %413 = vmatpush1.msra.mxu0 %v55
    %414 = vmatprep.subr.mxu0 0.0
    %415 = vmatpush2.msra.mxu0 0.0
    %416 = vmatprep.subr.mxu0 0.0
    %417 = vmatpush2.msra.mxu0 0.0
    %418 = vmatprep.subr.mxu0 0.0
    %419 = vmatpush2.msra.mxu0 0.0
    %420 = vmatprep.subr.mxu0 0.0
    %421 = vmatpush2.msra.mxu0 0.0
    %422 = vmatprep.subr.mxu0 0.0
    %423 = vmatpush2.msra.mxu0 0.0
    %424 = vmatprep.subr.mxu0 0.0
    %425 = vmatpush2.msra.mxu0 0.0
    %426 = vmatprep.subr.mxu0 0.0
    %427 = vmatpush2.msra.mxu0 0.0
    %428 = vmatprep.subr.mxu0 0.0
    %429 = vmatpush2.msra.mxu0 0.0
    %430 = vmatprep.subr.mxu0 0.0
    %431 = vmatpush2.msra.mxu0 0.0
    %432 = vmatprep.subr.mxu0 0.0
    %433 = vmatpush2.msra.mxu0 0.0
    %434 = vmatprep.subr.mxu0 0.0
    %435 = vmatpush2.msra.mxu0 0.0
    %436 = vmatprep.subr.mxu0 0.0
    %437 = vmatpush2.msra.mxu0 0.0
    %438 = vmatprep.subr.mxu0 0.0
    %439 = vmatpush2.msra.mxu0 0.0
    %440 = vmatprep.subr.mxu0 0.0
    %441 = vmatpush2.msra.mxu0 0.0
    %442 = vmatprep.subr.mxu0 0.0
    %443 = vmatpush2.msra.mxu0 0.0
    %444 = vmatprep.subr.mxu0 0.0
    %445 = vmatpush2.msra.mxu0 0.0
    %446 = vmatprep.mubr.f32.mxu0 0.0
    %447 = vmatmul.mubr.f32.gmra.mxu0 %v377
    %v448 = vpop.f32.mrf.mxu0
    %v449 = vadd.f32 0.0, %v448
    %v450 = vpop.f32.mrf.mxu0
    %451 = vmatprep.mubr.f32.mxu0 0.0
    %452 = vmatmul.mubr.f32.gmra.mxu0 %v380
    %v453 = vpop.f32.mrf.mxu0
    %v454 = vadd.f32 0.0, %v453
    %v455 = vpop.f32.mrf.mxu0
    %456 = vdwg.mxu0
    %v457 = vrcp.pop %v368
    %v458 = vmul.f32 %v449, %v457
    %v459 = vrcp.pop %v373
    %v460 = vmul.f32 %v454, %v459
    %v461 = vadd.f32 %v458, 1e-08
    %v462 = vadd.f32 %v460, 1e-08
    %v463 = vlog2.pop %v461
    %v464 = vmul.f32 %v463, 0.6931472
    %v465 = vlog2.pop %v462
    %v466 = vmul.f32 %v465, 0.6931472
    %v467 = vmul.f32 %v458, %v464
    %v468 = vmul.f32 %v460, %v466
    %469 = vmatprep.subr.mxu0 0.0
    %470 = vmatpush1.msra.mxu0 %v54
    %471 = vmatprep.subr.mxu0 0.0
    %472 = vmatpush1.msra.mxu0 %v53
    %473 = vmatprep.subr.mxu0 0.0
    %474 = vmatpush1.msra.mxu0 %v52
    %475 = vmatprep.subr.mxu0 0.0
    %476 = vmatpush1.msra.mxu0 %v51
    %477 = vmatprep.subr.mxu0 0.0
    %478 = vmatpush1.msra.mxu0 %v50
    %479 = vmatprep.subr.mxu0 0.0
    %480 = vmatpush1.msra.mxu0 %v49
    %481 = vmatprep.subr.mxu0 0.0
    %482 = vmatpush1.msra.mxu0 %v48
    %483 = vmatprep.subr.mxu0 0.0
    %484 = vmatpush1.msra.mxu0 %v47
    %485 = vmatprep.subr.mxu0 0.0
    %486 = vmatpush1.msra.mxu0 %v46
    %487 = vmatprep.subr.mxu0 0.0
    %488 = vmatpush1.msra.mxu0 %v45
    %489 = vmatprep.subr.mxu0 0.0
    %490 = vmatpush1.msra.mxu0 %v44
    %491 = vmatprep.subr.mxu0 0.0
    %492 = vmatpush1.msra.mxu0 %v43
    %493 = vmatprep.subr.mxu0 0.0
    %494 = vmatpush1.msra.mxu0 %v42
    %495 = vmatprep.subr.mxu0 0.0
    %496 = vmatpush1.msra.mxu0 %v41
    %497 = vmatprep.subr.mxu0 0.0
    %498 = vmatpush1.msra.mxu0 %v40
    %499 = vmatprep.subr.mxu0 0.0
    %500 = vmatpush1.msra.mxu0 %v39
    %501 = vmatprep.subr.mxu0 0.0
    %502 = vmatpush2.msra.mxu0 0.0
    %503 = vmatprep.subr.mxu0 0.0
    %504 = vmatpush2.msra.mxu0 0.0
    %505 = vmatprep.subr.mxu0 0.0
    %506 = vmatpush2.msra.mxu0 0.0
    %507 = vmatprep.subr.mxu0 0.0
    %508 = vmatpush2.msra.mxu0 0.0
    %509 = vmatprep.subr.mxu0 0.0
    %510 = vmatpush2.msra.mxu0 0.0
    %511 = vmatprep.subr.mxu0 0.0
    %512 = vmatpush2.msra.mxu0 0.0
    %513 = vmatprep.subr.mxu0 0.0
    %514 = vmatpush2.msra.mxu0 0.0
    %515 = vmatprep.subr.mxu0 0.0
    %516 = vmatpush2.msra.mxu0 0.0
    %517 = vmatprep.subr.mxu0 0.0
    %518 = vmatpush2.msra.mxu0 0.0
    %519 = vmatprep.subr.mxu0 0.0
    %520 = vmatpush2.msra.mxu0 0.0
    %521 = vmatprep.subr.mxu0 0.0
    %522 = vmatpush2.msra.mxu0 0.0
    %523 = vmatprep.subr.mxu0 0.0
    %524 = vmatpush2.msra.mxu0 0.0
    %525 = vmatprep.subr.mxu0 0.0
    %526 = vmatpush2.msra.mxu0 0.0
    %527 = vmatprep.subr.mxu0 0.0
    %528 = vmatpush2.msra.mxu0 0.0
    %529 = vmatprep.subr.mxu0 0.0
    %530 = vmatpush2.msra.mxu0 0.0
    %531 = vmatprep.subr.mxu0 0.0
    %532 = vmatpush2.msra.mxu0 0.0
    %533 = vmatprep.mubr.f32.mxu0 0.0
    %534 = vmatmul.mubr.f32.gmra.mxu0 %v467
    %v535 = vpop.f32.mrf.mxu0
    %v536 = vadd.f32 0.0, %v535
    %v537 = vpop.f32.mrf.mxu0
    %538 = vmatprep.mubr.f32.mxu0 0.0
    %539 = vmatmul.mubr.f32.gmra.mxu0 %v468
    %v540 = vpop.f32.mrf.mxu0
    %v541 = vadd.f32 0.0, %v540
    %v542 = vpop.f32.mrf.mxu0
    %543 = vdwg.mxu0
    %544 = vxpose.xlu0.b32.start [1/16] %v536, 128
    %545 = vxpose.xlu0.b32.cont [2/16] %v541, 128
    %546 = vxpose.xlu0.b32.cont [3/16] 0.0, 128
    %547 = vxpose.xlu0.b32.cont [4/16] 0.0, 128
    %548 = vxpose.xlu0.b32.cont [5/16] 0.0, 128
    %549 = vxpose.xlu0.b32.cont [6/16] 0.0, 128
    %550 = vxpose.xlu0.b32.cont [7/16] 0.0, 128
    %551 = vxpose.xlu0.b32.cont [8/16] 0.0, 128
    %552 = vxpose.xlu0.b32.cont [9/16] 0.0, 128
    %553 = vxpose.xlu0.b32.cont [10/16] 0.0, 128
    %554 = vxpose.xlu0.b32.cont [11/16] 0.0, 128
    %555 = vxpose.xlu0.b32.cont [12/16] 0.0, 128
    %556 = vxpose.xlu0.b32.cont [13/16] 0.0, 128
    %557 = vxpose.xlu0.b32.cont [14/16] 0.0, 128
    %558 = vxpose.xlu0.b32.cont [15/16] 0.0, 128
    %559 = vxpose.xlu0.b32.end [16/16] 0.0, 128
    %v560 = vpop.trf.xlu0
    %v561 = vpop.trf.xlu0
    %v562 = vpop.trf.xlu0
    %v563 = vpop.trf.xlu0
    %v564 = vpop.trf.xlu0
    %v565 = vpop.trf.xlu0
    %v566 = vpop.trf.xlu0
    %v567 = vpop.trf.xlu0
    %v568 = vpop.trf.xlu0
    %v569 = vpop.trf.xlu0
    %v570 = vpop.trf.xlu0
    %v571 = vpop.trf.xlu0
    %v572 = vpop.trf.xlu0
    %v573 = vpop.trf.xlu0
    %v574 = vpop.trf.xlu0
    %v575 = vpop.trf.xlu0
    %v576 = vadd.f32 %v536, %v560
    %v577 = vadd.f32 %v541, %v561
    %v578 = vsub.f32 0.0, %v576
    %v579 = vsub.f32 0.0, %v577
    %v580 = vmul.f32 %v241, 0.7
    %v581 = vmul.f32 %v242, 0.7
    %v582 = vmul.f32 %v578, 0.3
    %v583 = vmul.f32 %v579, 0.3
    %v584 = vadd.f32 %v580, %v582
    %v585 = vadd.f32 %v581, %v583
    %v586 = vadd.f32 %v584, %v56
    %v587 = vadd.f32 %v585, %v57
    %v588 = vsel %vm294, %v586, -inf
    %589 = vmax.xlane.f32.xlu0 %v588
    %v590 = vpop.xlane.xlu0 %589
    %v591 = vsel %vm294, %v587, -inf
    %592 = vmax.xlane.f32.xlu0 %v591
    %v593 = vpop.xlane.xlu0 %592
    %v594 = vsub.f32 %v586, %v590
    %v595 = vsub.f32 %v587, %v593
    %v596 = vmul.f32 %v594, 1.442695
    %v597 = vpow.pop %v596
    %v598 = vmul.f32 %v595, 1.442695
    %v599 = vpow.pop %v598
    %v600 = vsel %vm294, %v597, 0.0
    %601 = vadd.xlane.f32.xlu0 %v600
    %v602 = vpop.xlane.xlu0 %601
    %v603 = vsel %vm294, %v599, 0.0
    %604 = vadd.xlane.f32.xlu0 %v603
    %v605 = vpop.xlane.xlu0 %604
    %v606 = vrcp.pop %v602
    %v607 = vmul.f32 %v597, %v606
    %v608 = vrcp.pop %v605
    %v609 = vmul.f32 %v599, %v608
    %610 = vrot.lane.b32.xlu0 %v144, 64
    %v611 = vpop.permute.xlu0 %610
    %612 = vrot.lane.b32.xlu0 %v149, 64
    %v613 = vpop.permute.xlu0 %612
    %v617 = vsel %vm294, %v607, 0
    %v620 = vsel %vm294, %v609, 0
    %622 = vmatprep.subr.mxu0 0.0
    %623 = vmatpush1.msra.mxu0 0.0
    %624 = vmatprep.subr.mxu0 0.0
    %625 = vmatpush1.msra.mxu0 0.0
    %626 = vmatprep.subr.mxu0 0.0
    %627 = vmatpush1.msra.mxu0 0.0
    %628 = vmatprep.subr.mxu0 0.0
    %629 = vmatpush1.msra.mxu0 0.0
    %630 = vmatprep.subr.mxu0 0.0
    %631 = vmatpush1.msra.mxu0 0.0
    %632 = vmatprep.subr.mxu0 0.0
    %633 = vmatpush1.msra.mxu0 0.0
    %634 = vmatprep.subr.mxu0 0.0
    %635 = vmatpush1.msra.mxu0 0.0
    %636 = vmatprep.subr.mxu0 0.0
    %637 = vmatpush1.msra.mxu0 0.0
    %638 = vmatprep.subr.mxu0 0.0
    %639 = vmatpush1.msra.mxu0 0.0
    %640 = vmatprep.subr.mxu0 0.0
    %641 = vmatpush1.msra.mxu0 0.0
    %642 = vmatprep.subr.mxu0 0.0
    %643 = vmatpush1.msra.mxu0 0.0
    %644 = vmatprep.subr.mxu0 0.0
    %645 = vmatpush1.msra.mxu0 0.0
    %646 = vmatprep.subr.mxu0 0.0
    %647 = vmatpush1.msra.mxu0 0.0
    %648 = vmatprep.subr.mxu0 0.0
    %649 = vmatpush1.msra.mxu0 0.0
    %650 = vmatprep.subr.mxu0 0.0
    %651 = vmatpush1.msra.mxu0 %v613
    %652 = vmatprep.subr.mxu0 0.0
    %653 = vmatpush1.msra.mxu0 %v611
    %654 = vmatprep.subr.mxu0 0.0
    %655 = vmatpush2.msra.mxu0 0.0
    %656 = vmatprep.subr.mxu0 0.0
    %657 = vmatpush2.msra.mxu0 0.0
    %658 = vmatprep.subr.mxu0 0.0
    %659 = vmatpush2.msra.mxu0 0.0
    %660 = vmatprep.subr.mxu0 0.0
    %661 = vmatpush2.msra.mxu0 0.0
    %662 = vmatprep.subr.mxu0 0.0
    %663 = vmatpush2.msra.mxu0 0.0
    %664 = vmatprep.subr.mxu0 0.0
    %665 = vmatpush2.msra.mxu0 0.0
    %666 = vmatprep.subr.mxu0 0.0
    %667 = vmatpush2.msra.mxu0 0.0
    %668 = vmatprep.subr.mxu0 0.0
    %669 = vmatpush2.msra.mxu0 0.0
    %670 = vmatprep.subr.mxu0 0.0
    %671 = vmatpush2.msra.mxu0 0.0
    %672 = vmatprep.subr.mxu0 0.0
    %673 = vmatpush2.msra.mxu0 0.0
    %674 = vmatprep.subr.mxu0 0.0
    %675 = vmatpush2.msra.mxu0 0.0
    %676 = vmatprep.subr.mxu0 0.0
    %677 = vmatpush2.msra.mxu0 0.0
    %678 = vmatprep.subr.mxu0 0.0
    %679 = vmatpush2.msra.mxu0 0.0
    %680 = vmatprep.subr.mxu0 0.0
    %681 = vmatpush2.msra.mxu0 0.0
    %682 = vmatprep.subr.mxu0 0.0
    %683 = vmatpush2.msra.mxu0 0.0
    %684 = vmatprep.subr.mxu0 0.0
    %685 = vmatpush2.msra.mxu0 0.0
    %686 = vmatprep.mubr.f32.mxu0 0.0
    %687 = vmatmul.mubr.f32.gmra.mxu0 %v617
    %v688 = vpop.f32.mrf.mxu0
    %v689 = vadd.f32 0.0, %v688
    %v690 = vpop.f32.mrf.mxu0
    %691 = vmatprep.mubr.f32.mxu0 0.0
    %692 = vmatmul.mubr.f32.gmra.mxu0 %v620
    %v693 = vpop.f32.mrf.mxu0
    %v694 = vadd.f32 0.0, %v693
    %v695 = vpop.f32.mrf.mxu0
    %696 = vdwg.mxu0
    %v697 = vlaneseq
    %v698 = vshrl.u32 %v697, 7
    %v699 = vsub.s32 0, %v698
    %v700 = vrot.slane %v59, %v699
    %v702 = vsel %vm70, %v689, 0
    %v705 = vsel %vm70, %v694, 0
    %707 = vmatprep.subr.mxu0 0.0
    %708 = vmatpush1.msra.mxu0 0.0
    %709 = vmatprep.subr.mxu0 0.0
    %710 = vmatpush1.msra.mxu0 0.0
    %711 = vmatprep.subr.mxu0 0.0
    %712 = vmatpush1.msra.mxu0 0.0
    %713 = vmatprep.subr.mxu0 0.0
    %714 = vmatpush1.msra.mxu0 0.0
    %715 = vmatprep.subr.mxu0 0.0
    %716 = vmatpush1.msra.mxu0 0.0
    %717 = vmatprep.subr.mxu0 0.0
    %718 = vmatpush1.msra.mxu0 0.0
    %719 = vmatprep.subr.mxu0 0.0
    %720 = vmatpush1.msra.mxu0 0.0
    %721 = vmatprep.subr.mxu0 0.0
    %722 = vmatpush1.msra.mxu0 0.0
    %723 = vmatprep.subr.mxu0 0.0
    %724 = vmatpush1.msra.mxu0 0.0
    %725 = vmatprep.subr.mxu0 0.0
    %726 = vmatpush1.msra.mxu0 0.0
    %727 = vmatprep.subr.mxu0 0.0
    %728 = vmatpush1.msra.mxu0 0.0
    %729 = vmatprep.subr.mxu0 0.0
    %730 = vmatpush1.msra.mxu0 0.0
    %731 = vmatprep.subr.mxu0 0.0
    %732 = vmatpush1.msra.mxu0 %v24
    %733 = vmatprep.subr.mxu0 0.0
    %734 = vmatpush1.msra.mxu0 %v23
    %735 = vmatprep.subr.mxu0 0.0
    %736 = vmatpush1.msra.mxu0 %v22
    %737 = vmatprep.subr.mxu0 0.0
    %738 = vmatpush1.msra.mxu0 %v21
    %739 = vmatprep.subr.mxu0 0.0
    %740 = vmatpush2.msra.mxu0 0.0
    %741 = vmatprep.subr.mxu0 0.0
    %742 = vmatpush2.msra.mxu0 0.0
    %743 = vmatprep.subr.mxu0 0.0
    %744 = vmatpush2.msra.mxu0 0.0
    %745 = vmatprep.subr.mxu0 0.0
    %746 = vmatpush2.msra.mxu0 0.0
    %747 = vmatprep.subr.mxu0 0.0
    %748 = vmatpush2.msra.mxu0 0.0
    %749 = vmatprep.subr.mxu0 0.0
    %750 = vmatpush2.msra.mxu0 0.0
    %751 = vmatprep.subr.mxu0 0.0
    %752 = vmatpush2.msra.mxu0 0.0
    %753 = vmatprep.subr.mxu0 0.0
    %754 = vmatpush2.msra.mxu0 0.0
    %755 = vmatprep.subr.mxu0 0.0
    %756 = vmatpush2.msra.mxu0 0.0
    %757 = vmatprep.subr.mxu0 0.0
    %758 = vmatpush2.msra.mxu0 0.0
    %759 = vmatprep.subr.mxu0 0.0
    %760 = vmatpush2.msra.mxu0 0.0
    %761 = vmatprep.subr.mxu0 0.0
    %762 = vmatpush2.msra.mxu0 0.0
    %763 = vmatprep.subr.mxu0 0.0
    %764 = vmatpush2.msra.mxu0 0.0
    %765 = vmatprep.subr.mxu0 0.0
    %766 = vmatpush2.msra.mxu0 0.0
    %767 = vmatprep.subr.mxu0 0.0
    %768 = vmatpush2.msra.mxu0 0.0
    %769 = vmatprep.subr.mxu0 0.0
    %770 = vmatpush2.msra.mxu0 0.0
    %771 = vmatprep.mubr.f32.mxu0 0.0
    %772 = vmatmul.mubr.f32.gmra.mxu0 %v702
    %v773 = vpop.f32.mrf.mxu0
    %v774 = vadd.f32 %v700, %v773
    %v775 = vpop.f32.mrf.mxu0
    %776 = vmatprep.mubr.f32.mxu0 0.0
    %777 = vmatmul.mubr.f32.gmra.mxu0 %v705
    %v778 = vpop.f32.mrf.mxu0
    %v779 = vadd.f32 %v700, %v778
    %v780 = vpop.f32.mrf.mxu0
    %781 = vdwg.mxu0
    %v782 = vadd.f32 %v15, %v774
    %v783 = vadd.f32 %v16, %v779
    %v784 = vsel %vm70, %v782, 0.0
    %785 = vadd.xlane.f32.xlu0 %v784
    %v786 = vpop.xlane.xlu0 %785
    %v787 = vsel %vm70, %v783, 0.0
    %788 = vadd.xlane.f32.xlu0 %v787
    %v789 = vpop.xlane.xlu0 %788
    %v790 = vrcp.pop 32.0
    %v791 = vmul.f32 %v786, %v790
    %v792 = vmul.f32 %v789, %v790
    %v793 = vsub.f32 %v782, %v791
    %v794 = vsub.f32 %v783, %v792
    %v795 = vmul.f32 %v793, %v793
    %v796 = vmul.f32 %v794, %v794
    %v797 = vsel %vm70, %v795, 0.0
    %798 = vadd.xlane.f32.xlu0 %v797
    %v799 = vpop.xlane.xlu0 %798
    %v800 = vsel %vm70, %v796, 0.0
    %801 = vadd.xlane.f32.xlu0 %v800
    %v802 = vpop.xlane.xlu0 %801
    %v803 = vmul.f32 %v799, %v790
    %v804 = vmul.f32 %v802, %v790
    %v805 = vadd.f32 %v803, 1e-05
    %v806 = vadd.f32 %v804, 1e-05
    %v807 = vrsqrt.pop %v805
    %v808 = vrsqrt.pop %v806
    %v809 = vmul.f32 %v793, %v807
    %v810 = vmul.f32 %v794, %v808
    %v811 = vlaneseq
    %v812 = vshrl.u32 %v811, 7
    %v813 = vsub.s32 0, %v812
    %v814 = vrot.slane %v62, %v813
    %v815 = vmul.f32 %v809, %v814
    %v816 = vmul.f32 %v810, %v814
    %v817 = vlaneseq
    %v818 = vshrl.u32 %v817, 7
    %v819 = vsub.s32 0, %v818
    %v820 = vrot.slane %v63, %v819
    %v821 = vadd.f32 %v815, %v820
    %v822 = vadd.f32 %v816, %v820
    %v823 = vlaneseq
    %v824 = vshrl.u32 %v823, 7
    %v825 = vsub.s32 0, %v824
    %v826 = vrot.slane %v60, %v825
    %v828 = vsel %vm70, %v821, 0
    %v831 = vsel %vm70, %v822, 0
    %833 = vmatprep.subr.mxu0 0.0
    %834 = vmatpush1.msra.mxu0 0.0
    %835 = vmatprep.subr.mxu0 0.0
    %836 = vmatpush1.msra.mxu0 0.0
    %837 = vmatprep.subr.mxu0 0.0
    %838 = vmatpush1.msra.mxu0 0.0
    %839 = vmatprep.subr.mxu0 0.0
    %840 = vmatpush1.msra.mxu0 0.0
    %841 = vmatprep.subr.mxu0 0.0
    %842 = vmatpush1.msra.mxu0 0.0
    %843 = vmatprep.subr.mxu0 0.0
    %844 = vmatpush1.msra.mxu0 0.0
    %845 = vmatprep.subr.mxu0 0.0
    %846 = vmatpush1.msra.mxu0 0.0
    %847 = vmatprep.subr.mxu0 0.0
    %848 = vmatpush1.msra.mxu0 0.0
    %849 = vmatprep.subr.mxu0 0.0
    %850 = vmatpush1.msra.mxu0 0.0
    %851 = vmatprep.subr.mxu0 0.0
    %852 = vmatpush1.msra.mxu0 0.0
    %853 = vmatprep.subr.mxu0 0.0
    %854 = vmatpush1.msra.mxu0 0.0
    %855 = vmatprep.subr.mxu0 0.0
    %856 = vmatpush1.msra.mxu0 0.0
    %857 = vmatprep.subr.mxu0 0.0
    %858 = vmatpush1.msra.mxu0 %v28
    %859 = vmatprep.subr.mxu0 0.0
    %860 = vmatpush1.msra.mxu0 %v27
    %861 = vmatprep.subr.mxu0 0.0
    %862 = vmatpush1.msra.mxu0 %v26
    %863 = vmatprep.subr.mxu0 0.0
    %864 = vmatpush1.msra.mxu0 %v25
    %865 = vmatprep.subr.mxu0 0.0
    %866 = vmatpush2.msra.mxu0 0.0
    %867 = vmatprep.subr.mxu0 0.0
    %868 = vmatpush2.msra.mxu0 0.0
    %869 = vmatprep.subr.mxu0 0.0
    %870 = vmatpush2.msra.mxu0 0.0
    %871 = vmatprep.subr.mxu0 0.0
    %872 = vmatpush2.msra.mxu0 0.0
    %873 = vmatprep.subr.mxu0 0.0
    %874 = vmatpush2.msra.mxu0 0.0
    %875 = vmatprep.subr.mxu0 0.0
    %876 = vmatpush2.msra.mxu0 0.0
    %877 = vmatprep.subr.mxu0 0.0
    %878 = vmatpush2.msra.mxu0 0.0
    %879 = vmatprep.subr.mxu0 0.0
    %880 = vmatpush2.msra.mxu0 0.0
    %881 = vmatprep.subr.mxu0 0.0
    %882 = vmatpush2.msra.mxu0 0.0
    %883 = vmatprep.subr.mxu0 0.0
    %884 = vmatpush2.msra.mxu0 0.0
    %885 = vmatprep.subr.mxu0 0.0
    %886 = vmatpush2.msra.mxu0 0.0
    %887 = vmatprep.subr.mxu0 0.0
    %888 = vmatpush2.msra.mxu0 0.0
    %889 = vmatprep.subr.mxu0 0.0
    %890 = vmatpush2.msra.mxu0 0.0
    %891 = vmatprep.subr.mxu0 0.0
    %892 = vmatpush2.msra.mxu0 0.0
    %893 = vmatprep.subr.mxu0 0.0
    %894 = vmatpush2.msra.mxu0 0.0
    %895 = vmatprep.subr.mxu0 0.0
    %896 = vmatpush2.msra.mxu0 0.0
    %897 = vmatprep.mubr.f32.mxu0 0.0
    %898 = vmatmul.mubr.f32.gmra.mxu0 %v828
    %v899 = vpop.f32.mrf.mxu0
    %v900 = vadd.f32 %v826, %v899
    %v901 = vpop.f32.mrf.mxu0
    %902 = vmatprep.mubr.f32.mxu0 0.0
    %903 = vmatmul.mubr.f32.gmra.mxu0 %v831
    %v904 = vpop.f32.mrf.mxu0
    %v905 = vadd.f32 %v826, %v904
    %v906 = vpop.f32.mrf.mxu0
    %907 = vdwg.mxu0
    %v908 = vmax.f32 %v900, 0.0
    %v909 = vmax.f32 %v905, 0.0
    %v910 = vlaneseq
    %v911 = vshrl.u32 %v910, 7
    %v912 = vsub.s32 0, %v911
    %v913 = vrot.slane %v61, %v912
    %vm914 = vcmask 523264
    %v916 = vsel %vm914, %v908, 0
    %v919 = vsel %vm914, %v909, 0
    %921 = vmatprep.subr.mxu0 0.0
    %922 = vmatpush1.msra.mxu0 0.0
    %923 = vmatprep.subr.mxu0 0.0
    %924 = vmatpush1.msra.mxu0 0.0
    %925 = vmatprep.subr.mxu0 0.0
    %926 = vmatpush1.msra.mxu0 0.0
    %927 = vmatprep.subr.mxu0 0.0
    %928 = vmatpush1.msra.mxu0 0.0
    %929 = vmatprep.subr.mxu0 0.0
    %930 = vmatpush1.msra.mxu0 0.0
    %931 = vmatprep.subr.mxu0 0.0
    %932 = vmatpush1.msra.mxu0 0.0
    %933 = vmatprep.subr.mxu0 0.0
    %934 = vmatpush1.msra.mxu0 0.0
    %935 = vmatprep.subr.mxu0 0.0
    %936 = vmatpush1.msra.mxu0 0.0
    %937 = vmatprep.subr.mxu0 0.0
    %938 = vmatpush1.msra.mxu0 %v36
    %939 = vmatprep.subr.mxu0 0.0
    %940 = vmatpush1.msra.mxu0 %v35
    %941 = vmatprep.subr.mxu0 0.0
    %942 = vmatpush1.msra.mxu0 %v34
    %943 = vmatprep.subr.mxu0 0.0
    %944 = vmatpush1.msra.mxu0 %v33
    %945 = vmatprep.subr.mxu0 0.0
    %946 = vmatpush1.msra.mxu0 %v32
    %947 = vmatprep.subr.mxu0 0.0
    %948 = vmatpush1.msra.mxu0 %v31
    %949 = vmatprep.subr.mxu0 0.0
    %950 = vmatpush1.msra.mxu0 %v30
    %951 = vmatprep.subr.mxu0 0.0
    %952 = vmatpush1.msra.mxu0 %v29
    %953 = vmatprep.subr.mxu0 0.0
    %954 = vmatpush2.msra.mxu0 0.0
    %955 = vmatprep.subr.mxu0 0.0
    %956 = vmatpush2.msra.mxu0 0.0
    %957 = vmatprep.subr.mxu0 0.0
    %958 = vmatpush2.msra.mxu0 0.0
    %959 = vmatprep.subr.mxu0 0.0
    %960 = vmatpush2.msra.mxu0 0.0
    %961 = vmatprep.subr.mxu0 0.0
    %962 = vmatpush2.msra.mxu0 0.0
    %963 = vmatprep.subr.mxu0 0.0
    %964 = vmatpush2.msra.mxu0 0.0
    %965 = vmatprep.subr.mxu0 0.0
    %966 = vmatpush2.msra.mxu0 0.0
    %967 = vmatprep.subr.mxu0 0.0
    %968 = vmatpush2.msra.mxu0 0.0
    %969 = vmatprep.subr.mxu0 0.0
    %970 = vmatpush2.msra.mxu0 0.0
    %971 = vmatprep.subr.mxu0 0.0
    %972 = vmatpush2.msra.mxu0 0.0
    %973 = vmatprep.subr.mxu0 0.0
    %974 = vmatpush2.msra.mxu0 0.0
    %975 = vmatprep.subr.mxu0 0.0
    %976 = vmatpush2.msra.mxu0 0.0
    %977 = vmatprep.subr.mxu0 0.0
    %978 = vmatpush2.msra.mxu0 0.0
    %979 = vmatprep.subr.mxu0 0.0
    %980 = vmatpush2.msra.mxu0 0.0
    %981 = vmatprep.subr.mxu0 0.0
    %982 = vmatpush2.msra.mxu0 0.0
    %983 = vmatprep.subr.mxu0 0.0
    %984 = vmatpush2.msra.mxu0 0.0
    %985 = vmatprep.mubr.f32.mxu0 0.0
    %986 = vmatmul.mubr.f32.gmra.mxu0 %v916
    %v987 = vpop.f32.mrf.mxu0
    %v988 = vadd.f32 %v913, %v987
    %v989 = vpop.f32.mrf.mxu0
    %990 = vmatprep.mubr.f32.mxu0 0.0
    %991 = vmatmul.mubr.f32.gmra.mxu0 %v919
    %v992 = vpop.f32.mrf.mxu0
    %v993 = vadd.f32 %v913, %v992
    %v994 = vpop.f32.mrf.mxu0
    %995 = vdwg.mxu0
    %v996 = vadd.f32 %v821, %v988
    %v997 = vadd.f32 %v822, %v993
    %v998 = vsel %vm70, %v996, 0.0
    %999 = vadd.xlane.f32.xlu0 %v998
    %v1000 = vpop.xlane.xlu0 %999
    %v1001 = vsel %vm70, %v997, 0.0
    %1002 = vadd.xlane.f32.xlu0 %v1001
    %v1003 = vpop.xlane.xlu0 %1002
    %v1004 = vmul.f32 %v1000, %v790
    %v1005 = vmul.f32 %v1003, %v790
    %v1006 = vsub.f32 %v996, %v1004
    %v1007 = vsub.f32 %v997, %v1005
    %v1008 = vmul.f32 %v1006, %v1006
    %v1009 = vmul.f32 %v1007, %v1007
    %v1010 = vsel %vm70, %v1008, 0.0
    %1011 = vadd.xlane.f32.xlu0 %v1010
    %v1012 = vpop.xlane.xlu0 %1011
    %v1013 = vsel %vm70, %v1009, 0.0
    %1014 = vadd.xlane.f32.xlu0 %v1013
    %v1015 = vpop.xlane.xlu0 %1014
    %v1016 = vmul.f32 %v1012, %v790
    %v1017 = vmul.f32 %v1015, %v790
    %v1018 = vadd.f32 %v1016, 1e-05
    %v1019 = vadd.f32 %v1017, 1e-05
    %v1020 = vrsqrt.pop %v1018
    %v1021 = vrsqrt.pop %v1019
    %v1022 = vmul.f32 %v1006, %v1020
    %v1023 = vmul.f32 %v1007, %v1021
    %v1024 = vlaneseq
    %v1025 = vshrl.u32 %v1024, 7
    %v1026 = vsub.s32 0, %v1025
    %v1027 = vrot.slane %v64, %v1026
    %v1028 = vmul.f32 %v1022, %v1027
    %v1029 = vmul.f32 %v1023, %v1027
    %v1030 = vlaneseq
    %v1031 = vshrl.u32 %v1030, 7
    %v1032 = vsub.s32 0, %v1031
    %v1033 = vrot.slane %v65, %v1032
    %v1034 = vadd.f32 %v1028, %v1033
    %v1035 = vadd.f32 %v1029, %v1033
    %1036 = vst.msk [vmem:[#allocation2] sm:$0xff] %vm70, %v1034
    %1037 = vst.msk [vmem:[#allocation2 + $0x8] sm:$0xff] %vm70, %v1035
    // Predicated region
    $region14: #{quantum_transformer_block.1} parent=1 // pred_check
      _
    $region15: #{quantum_transformer_block.1} parent=1 // pred_check_branch
      %1039 = sbr.rel (0) target = $region17
    $region16: #{quantum_transformer_block.1} parent=1 // pred_region
      %s1041 = ssub.s32 256, 256
      %1042 = vsyncadd [#allocation3], %s1041
      %s1043 = sshll.u32 [#allocation2], 4
      %s1044 = int_to_ptr.vmem [resolvable:$true] %s1043
      %1049 = dma.vmem_to_hbm [thread:$0]  %s1044, 256, %s3, [#allocation3], 128, 128, 8
    $region17: #{quantum_transformer_block.1} parent=1 // pred_fallthru
      _
    // Predicated region
    $region18: #{quantum_transformer_block.1} parent=1 // pred_check
      _
    $region19: #{quantum_transformer_block.1} parent=1 // pred_check_branch
      %1051 = sbr.rel (0) target = $region21
    $region20: #{quantum_transformer_block.1} parent=1 // pred_region
      %1052 = dma.done [#allocation3], 256
    $region21: #{quantum_transformer_block.1} parent=1 // pred_fallthru
      _
    %1053 = vsyncpa [#allocation3], 1

</llo_original>
